<compile_context>
chip_gen: v7x
topology: tpu7x:2x2x1
jax: 0.10.0
libtpu: 0.0.40
codegen_flags: <defaults>
</compile_context>

<pallas_src>
import jax
import jax.numpy as jnp
import numpy as np
from jax import lax
from jax.experimental import pallas as pl
from jax.experimental.pallas import tpu as pltpu


def _round_up(x, m):
    return ((x + m - 1) // m) * m


def social_agg_kernel(e_ref, u_ref, c_ref,
                      w1a_ref, w1b_ref, b1_ref, w2_ref, b2_ref, w3_ref,
                      o_ref):
    TB, N, D = e_ref.shape

    e = e_ref[...]                        # (TB, N, D) neighbor embeddings
    u = u_ref[...]                        # (TB, D)    self embeddings
    counts = c_ref[...]                   # (TB, 1)    int32 neighbor counts

    # Flatten neighbors into one big-M MXU operand (N is a multiple of 8, so
    # the (TB*N, D) <-> (TB, N, D) reshapes are sublane-tile-aligned / free).
    e2 = e.reshape(TB * N, D)

    # att1: Linear(2D->D) on concat([e_u, u_rep]) == e @ w1a + u @ w1b + b1.
    # Self-embedding projection hoisted out of the neighbor axis.
    u_proj = jnp.dot(u, w1b_ref[...], preferred_element_type=jnp.float32) + b1_ref[...]
    h1 = jnp.dot(e2, w1a_ref[...], preferred_element_type=jnp.float32)
    h1 = h1.reshape(TB, N, D) + u_proj[:, None, :]
    h1 = jnp.maximum(h1, 0.0)
    # TODO(synk): F.dropout is identity in eval mode; training-mode dropout not implemented.

    # att2: Linear(D->D) + ReLU (flat big-M matmul again).
    h2 = jnp.dot(h1.reshape(TB * N, D), w2_ref[...],
                 preferred_element_type=jnp.float32) + b2_ref[...]
    h2 = jnp.maximum(h2, 0.0)

    # att3: Linear(D->1) as VPU multiply + lane reduction (no 1-wide MXU call).
    # The scalar bias b3 cancels under softmax and is omitted.
    logits = jnp.sum(h2 * w3_ref[...], axis=-1, keepdims=True)   # (TB*N, 1)
    logits = logits.reshape(TB, N, 1)

    # Masked softmax over the neighbor (sublane) axis; mask rebuilt in-kernel.
    neigh_iota = lax.broadcasted_iota(jnp.int32, (TB, N, 1), 1)
    valid = neigh_iota < counts[:, None, :]                      # (TB, N, 1)
    logits = jnp.where(valid, logits, jnp.float32(-1e30))
    m_max = jnp.max(logits, axis=1, keepdims=True)               # (TB, 1, 1)
    p = jnp.exp(logits - m_max)
    p = jnp.where(valid, p, 0.0)                                 # padding -> exactly 0
    denom = jnp.maximum(jnp.sum(p, axis=1, keepdims=True), jnp.float32(1e-30))
    att = p / denom                                              # (TB, N, 1)

    # att_history = (e_u.T @ att_w).T == sum_n att_n * e_u[n]
    o_ref[...] = jnp.sum(att * e, axis=1).astype(o_ref.dtype)    # (TB, D)


def social_aggregator(neigh_emb, self_emb, counts, params, block_b=None):
    """neigh_emb: (B, N, D) f32, self_emb: (B, D) f32, counts: (B,) int."""
    B, N, D = neigh_emb.shape
    w1, b1, w2, b2, w3, b3 = params
    del b3  # uniform scalar bias on logits cancels under softmax

    if block_b is None:
        # Whole toy problem in one grid step; at realistic B this caps the
        # block so double-buffered inputs stay well inside v7x's 64 MiB VMEM.
        block_b = min(128, _round_up(B, 8))
    block_b = _round_up(block_b, 8)
    B_pad = _round_up(B, block_b)
    if B_pad != B:
        pad = B_pad - B
        neigh_emb = jnp.pad(neigh_emb, ((0, pad), (0, 0), (0, 0)))
        self_emb = jnp.pad(self_emb, ((0, pad), (0, 0)))
        counts = jnp.pad(counts, ((0, pad),))

    # Pre-split att1 weight: concat([e, u]) @ w1 == e @ w1a + u @ w1b.
    w1a = w1[:D, :]
    w1b = w1[D:, :]
    w3_row = w3.reshape(1, D)            # (D, 1) column -> (1, D) row

    grid = (B_pad // block_b,)
    out = pl.pallas_call(
        social_agg_kernel,
        out_shape=jax.ShapeDtypeStruct((B_pad, D), jnp.float32),
        grid=grid,
        in_specs=[
            pl.BlockSpec((block_b, N, D), lambda i: (i, 0, 0)),   # neighbor embeddings
            pl.BlockSpec((block_b, D),    lambda i: (i, 0)),      # self embeddings
            pl.BlockSpec((block_b, 1),    lambda i: (i, 0)),      # neighbor counts
            pl.BlockSpec((D, D), lambda i: (0, 0)),               # w1a (VMEM-resident)
            pl.BlockSpec((D, D), lambda i: (0, 0)),               # w1b (VMEM-resident)
            pl.BlockSpec((1, D), lambda i: (0, 0)),               # b1
            pl.BlockSpec((D, D), lambda i: (0, 0)),               # w2  (VMEM-resident)
            pl.BlockSpec((1, D), lambda i: (0, 0)),               # b2
            pl.BlockSpec((1, D), lambda i: (0, 0)),               # w3 as a row
        ],
        out_specs=pl.BlockSpec((block_b, D), lambda i: (i, 0)),
        compiler_params=pltpu.CompilerParams(
            dimension_semantics=("parallel",)),                   # v7x: 2 TCs
    )(neigh_emb,
      self_emb,
      counts.reshape(B_pad, 1).astype(jnp.int32),
      w1a, w1b, b1.reshape(1, D), w2, b2.reshape(1, D), w3_row)
    return out[:B]


def reference(neigh_emb, self_emb, mask, params):
    """Plain-JAX reference of the same forward (for verification)."""
    w1, b1, w2, b2, w3, b3 = params
    B, N, D = neigh_emb.shape
    u_rep = jnp.broadcast_to(self_emb[:, None, :], (B, N, D))
    x = jnp.concatenate([neigh_emb, u_rep], axis=-1)          # (B, N, 2D)
    h1 = jax.nn.relu(x @ w1 + b1)
    h2 = jax.nn.relu(h1 @ w2 + b2)
    logits = h2 @ w3 + b3                                     # (B, N, 1)
    logits = jnp.where(mask[..., None] > 0.0, logits, -1e30)
    att = jax.nn.softmax(logits, axis=1) * mask[..., None]
    att = att / jnp.sum(att, axis=1, keepdims=True)
    return jnp.sum(att * neigh_emb, axis=1)                   # (B, D)


if __name__ == "__main__":
    key = jax.random.PRNGKey(0)
    num_users = 20        # rows in u2e embedding table
    embed_dim = 32        # D
    B = 4                 # number of nodes aggregated
    N = 8                 # max (padded) neighbors per node

    ks = jax.random.split(key, 10)

    # deterministic synthetic parameters (shapes from Attention(embed_dim))
    u2e_weight = jax.random.normal(ks[0], (num_users, embed_dim), jnp.float32) * 0.5
    w1 = jax.random.normal(ks[1], (2 * embed_dim, embed_dim), jnp.float32) * 0.1
    b1 = jax.random.normal(ks[2], (embed_dim,), jnp.float32) * 0.1
    w2 = jax.random.normal(ks[3], (embed_dim, embed_dim), jnp.float32) * 0.1
    b2 = jax.random.normal(ks[4], (embed_dim,), jnp.float32) * 0.1
    w3 = jax.random.normal(ks[5], (embed_dim, 1), jnp.float32) * 0.1
    b3 = jax.random.normal(ks[6], (1,), jnp.float32) * 0.1
    params = (w1, b1, w2, b2, w3, b3)

    # nodes + ragged social neighbor lists, padded to N with per-node counts
    nodes = jnp.array([3, 7, 11, 0], dtype=jnp.int32)                     # (B,)
    neigh_counts = np.array([3, 8, 5, 1], dtype=np.int32)                 # per-node degree
    neigh_idx = np.asarray(
        jax.random.randint(ks[7], (B, N), 0, num_users), dtype=np.int32)  # (B, N)
    mask_np = (np.arange(N)[None, :] < neigh_counts[:, None]).astype(np.float32)
    neigh_idx = neigh_idx * mask_np.astype(np.int32)                      # padding -> index 0 (masked out)

    neigh_idx = jnp.asarray(neigh_idx)
    mask = jnp.asarray(mask_np)
    counts = jnp.asarray(neigh_counts)

    # glue (plain JAX): embedding-table gathers, exactly u2e(tmp_adj) / u2e.weight[nodes[i]]
    neigh_emb = u2e_weight[neigh_idx]          # (B, N, D)
    self_emb = u2e_weight[nodes]               # (B, D)

    out = social_aggregator(neigh_emb, self_emb, counts, params)
    out = jax.block_until_ready(out)

    ref = jax.block_until_ready(reference(neigh_emb, self_emb, mask, params))
    assert out.shape == (B, embed_dim)
    assert np.allclose(np.asarray(out), np.asarray(ref), atol=1e-5, rtol=1e-5), (
        "kernel output mismatch vs reference")

    print("KERNEL_OK")
</pallas_src>

<mosaic_0001>
module attributes {stable_mosaic.version = 11 : i64} {
  func.func @social_agg_kernel(%arg0: i32, %arg1: memref<8x8x32xf32, #tpu.memory_space<vmem>>, %arg2: memref<8x32xf32, #tpu.memory_space<vmem>>, %arg3: memref<8x1xi32, #tpu.memory_space<vmem>>, %arg4: memref<32x32xf32, #tpu.memory_space<vmem>>, %arg5: memref<32x32xf32, #tpu.memory_space<vmem>>, %arg6: memref<1x32xf32, #tpu.memory_space<vmem>>, %arg7: memref<32x32xf32, #tpu.memory_space<vmem>>, %arg8: memref<1x32xf32, #tpu.memory_space<vmem>>, %arg9: memref<1x32xf32, #tpu.memory_space<vmem>>, %arg10: memref<8x32xf32, #tpu.memory_space<vmem>>) attributes {dimension_semantics = [#tpu.dimension_semantics<parallel>], iteration_bounds = array<i64: 1>, scalar_prefetch = 0 : i64, scratch_operands = 0 : i64, tpu.core_type = #tpu.core_type<tc>, window_params = [{transform_indices = @transform_0, window_bounds = array<i64: 8, 8, 32>}, {transform_indices = @transform_1, window_bounds = array<i64: 8, 32>}, {transform_indices = @transform_2, window_bounds = array<i64: 8, 1>}, {pipeline_mode = #tpu.pipeline_mode<synchronous>, transform_indices = @transform_3, window_bounds = array<i64: 32, 32>}, {pipeline_mode = #tpu.pipeline_mode<synchronous>, transform_indices = @transform_4, window_bounds = array<i64: 32, 32>}, {pipeline_mode = #tpu.pipeline_mode<synchronous>, transform_indices = @transform_5, window_bounds = array<i64: 1, 32>}, {pipeline_mode = #tpu.pipeline_mode<synchronous>, transform_indices = @transform_6, window_bounds = array<i64: 32, 32>}, {pipeline_mode = #tpu.pipeline_mode<synchronous>, transform_indices = @transform_7, window_bounds = array<i64: 1, 32>}, {pipeline_mode = #tpu.pipeline_mode<synchronous>, transform_indices = @transform_8, window_bounds = array<i64: 1, 32>}, {transform_indices = @transform_9, window_bounds = array<i64: 8, 32>}]} {
    %c0 = arith.constant 0 : index
    %c0_0 = arith.constant 0 : index
    %c0_1 = arith.constant 0 : index
    %0 = vector.load %arg1[%c0, %c0_0, %c0_1] : memref<8x8x32xf32, #tpu.memory_space<vmem>>, vector<8x8x32xf32>
    %c0_2 = arith.constant 0 : index
    %c0_3 = arith.constant 0 : index
    %1 = vector.load %arg2[%c0_2, %c0_3] : memref<8x32xf32, #tpu.memory_space<vmem>>, vector<8x32xf32>
    %c0_4 = arith.constant 0 : index
    %c0_5 = arith.constant 0 : index
    %2 = vector.load %arg3[%c0_4, %c0_5] : memref<8x1xi32, #tpu.memory_space<vmem>>, vector<8x1xi32>
    %3 = vector.shape_cast %0 : vector<8x8x32xf32> to vector<64x32xf32>
    %c0_6 = arith.constant 0 : index
    %c0_7 = arith.constant 0 : index
    %4 = vector.load %arg5[%c0_6, %c0_7] : memref<32x32xf32, #tpu.memory_space<vmem>>, vector<32x32xf32>
    %cst = arith.constant dense<0.000000e+00> : vector<8x32xf32>
    %5 = tpu.matmul %1, %4, %cst {dimension_numbers = #tpu.dot_dimension_numbers<[1], [0], [0], [1], [0, 0, 1, 1], [], []>} : vector<8x32xf32>, vector<32x32xf32>, vector<8x32xf32> -> vector<8x32xf32>
    %c0_8 = arith.constant 0 : index
    %c0_9 = arith.constant 0 : index
    %6 = vector.load %arg6[%c0_8, %c0_9] : memref<1x32xf32, #tpu.memory_space<vmem>>, vector<1x32xf32>
    %7 = vector.broadcast %6 : vector<1x32xf32> to vector<8x32xf32>
    %8 = arith.addf %5, %7 : vector<8x32xf32>
    %c0_10 = arith.constant 0 : index
    %c0_11 = arith.constant 0 : index
    %9 = vector.load %arg4[%c0_10, %c0_11] : memref<32x32xf32, #tpu.memory_space<vmem>>, vector<32x32xf32>
    %cst_12 = arith.constant dense<0.000000e+00> : vector<64x32xf32>
    %10 = tpu.matmul %3, %9, %cst_12 {dimension_numbers = #tpu.dot_dimension_numbers<[1], [0], [0], [1], [0, 0, 1, 1], [], []>} : vector<64x32xf32>, vector<32x32xf32>, vector<64x32xf32> -> vector<64x32xf32>
    %11 = vector.shape_cast %10 : vector<64x32xf32> to vector<8x8x32xf32>
    %12 = vector.shape_cast %8 : vector<8x32xf32> to vector<8x1x32xf32>
    %13 = vector.broadcast %12 : vector<8x1x32xf32> to vector<8x8x32xf32>
    %14 = arith.addf %11, %13 : vector<8x8x32xf32>
    %cst_13 = arith.constant 0.000000e+00 : f32
    %15 = vector.broadcast %cst_13 : f32 to vector<8x8x32xf32>
    %16 = arith.maximumf %14, %15 : vector<8x8x32xf32>
    %17 = vector.shape_cast %16 : vector<8x8x32xf32> to vector<64x32xf32>
    %c0_14 = arith.constant 0 : index
    %c0_15 = arith.constant 0 : index
    %18 = vector.load %arg7[%c0_14, %c0_15] : memref<32x32xf32, #tpu.memory_space<vmem>>, vector<32x32xf32>
    %cst_16 = arith.constant dense<0.000000e+00> : vector<64x32xf32>
    %19 = tpu.matmul %17, %18, %cst_16 {dimension_numbers = #tpu.dot_dimension_numbers<[1], [0], [0], [1], [0, 0, 1, 1], [], []>} : vector<64x32xf32>, vector<32x32xf32>, vector<64x32xf32> -> vector<64x32xf32>
    %c0_17 = arith.constant 0 : index
    %c0_18 = arith.constant 0 : index
    %20 = vector.load %arg8[%c0_17, %c0_18] : memref<1x32xf32, #tpu.memory_space<vmem>>, vector<1x32xf32>
    %21 = vector.broadcast %20 : vector<1x32xf32> to vector<64x32xf32>
    %22 = arith.addf %19, %21 : vector<64x32xf32>
    %cst_19 = arith.constant 0.000000e+00 : f32
    %23 = vector.broadcast %cst_19 : f32 to vector<64x32xf32>
    %24 = arith.maximumf %22, %23 : vector<64x32xf32>
    %c0_20 = arith.constant 0 : index
    %c0_21 = arith.constant 0 : index
    %25 = vector.load %arg9[%c0_20, %c0_21] : memref<1x32xf32, #tpu.memory_space<vmem>>, vector<1x32xf32>
    %26 = vector.broadcast %25 : vector<1x32xf32> to vector<64x32xf32>
    %27 = arith.mulf %24, %26 : vector<64x32xf32>
    %cst_22 = arith.constant dense<0.000000e+00> : vector<64xf32>
    %28 = vector.multi_reduction <add>, %27, %cst_22 [1] : vector<64x32xf32> to vector<64xf32>
    %29 = vector.shape_cast %28 : vector<64xf32> to vector<64x1xf32>
    %30 = vector.shape_cast %29 : vector<64x1xf32> to vector<8x8x1xf32>
    %31 = tpu.iota {dimensions = array<i32: 1>} : vector<8x8x1xi32>
    %32 = vector.shape_cast %2 : vector<8x1xi32> to vector<8x1x1xi32>
    %33 = vector.broadcast %32 : vector<8x1x1xi32> to vector<8x8x1xi32>
    %34 = arith.cmpi slt, %31, %33 : vector<8x8x1xi32>
    %cst_23 = arith.constant -1.000000e+30 : f32
    %35 = vector.broadcast %cst_23 : f32 to vector<8x8x1xf32>
    %36 = arith.select %34, %30, %35 : vector<8x8x1xi1>, vector<8x8x1xf32>
    %cst_24 = arith.constant dense<0xFF800000> : vector<8x1xf32>
    %37 = vector.multi_reduction <maximumf>, %36, %cst_24 [1] : vector<8x8x1xf32> to vector<8x1xf32>
    %38 = vector.shape_cast %37 : vector<8x1xf32> to vector<8x1x1xf32>
    %39 = vector.broadcast %38 : vector<8x1x1xf32> to vector<8x8x1xf32>
    %40 = arith.subf %36, %39 : vector<8x8x1xf32>
    %41 = math.exp %40 : vector<8x8x1xf32>
    %cst_25 = arith.constant 0.000000e+00 : f32
    %42 = vector.broadcast %cst_25 : f32 to vector<8x8x1xf32>
    %43 = arith.select %34, %41, %42 : vector<8x8x1xi1>, vector<8x8x1xf32>
    %cst_26 = arith.constant dense<0.000000e+00> : vector<8x1xf32>
    %44 = vector.multi_reduction <add>, %43, %cst_26 [1] : vector<8x8x1xf32> to vector<8x1xf32>
    %45 = vector.shape_cast %44 : vector<8x1xf32> to vector<8x1x1xf32>
    %cst_27 = arith.constant 1.000000e-30 : f32
    %46 = vector.broadcast %cst_27 : f32 to vector<8x1x1xf32>
    %47 = arith.maximumf %45, %46 : vector<8x1x1xf32>
    %48 = vector.broadcast %47 : vector<8x1x1xf32> to vector<8x8x1xf32>
    %49 = arith.divf %43, %48 : vector<8x8x1xf32>
    %50 = vector.broadcast %49 : vector<8x8x1xf32> to vector<8x8x32xf32>
    %51 = arith.mulf %50, %0 : vector<8x8x32xf32>
    %cst_28 = arith.constant dense<0.000000e+00> : vector<8x32xf32>
    %52 = vector.multi_reduction <add>, %51, %cst_28 [1] : vector<8x8x32xf32> to vector<8x32xf32>
    %c0_29 = arith.constant 0 : index
    %c0_30 = arith.constant 0 : index
    %53 = vector.load %arg10[%c0_29, %c0_30] : memref<8x32xf32, #tpu.memory_space<vmem>>, vector<8x32xf32>
    tpu.vector_store %arg10[%c0_29, %c0_30], %52 {strides = array<i32>} : memref<8x32xf32, #tpu.memory_space<vmem>>, vector<8x32xf32>,
    return
  }
  func.func @transform_0(%arg0: i32) -> (i32, i32, i32) {
    %c0_i32 = arith.constant 0 : i32
    %c0_i32_0 = arith.constant 0 : i32
    %c0_i32_1 = arith.constant 0 : i32
    return %arg0, %c0_i32, %c0_i32_0 : i32, i32, i32
  }
  func.func @transform_1(%arg0: i32) -> (i32, i32) {
    %c0_i32 = arith.constant 0 : i32
    %c0_i32_0 = arith.constant 0 : i32
    return %arg0, %c0_i32 : i32, i32
  }
  func.func @transform_2(%arg0: i32) -> (i32, i32) {
    %c0_i32 = arith.constant 0 : i32
    %c0_i32_0 = arith.constant 0 : i32
    return %arg0, %c0_i32 : i32, i32
  }
  func.func @transform_3(%arg0: i32) -> (i32, i32) {
    %c0_i32 = arith.constant 0 : i32
    %c0_i32_0 = arith.constant 0 : i32
    %c0_i32_1 = arith.constant 0 : i32
    return %c0_i32, %c0_i32_0 : i32, i32
  }
  func.func @transform_4(%arg0: i32) -> (i32, i32) {
    %c0_i32 = arith.constant 0 : i32
    %c0_i32_0 = arith.constant 0 : i32
    %c0_i32_1 = arith.constant 0 : i32
    return %c0_i32, %c0_i32_0 : i32, i32
  }
  func.func @transform_5(%arg0: i32) -> (i32, i32) {
    %c0_i32 = arith.constant 0 : i32
    %c0_i32_0 = arith.constant 0 : i32
    %c0_i32_1 = arith.constant 0 : i32
    return %c0_i32, %c0_i32_0 : i32, i32
  }
  func.func @transform_6(%arg0: i32) -> (i32, i32) {
    %c0_i32 = arith.constant 0 : i32
    %c0_i32_0 = arith.constant 0 : i32
    %c0_i32_1 = arith.constant 0 : i32
    return %c0_i32, %c0_i32_0 : i32, i32
  }
  func.func @transform_7(%arg0: i32) -> (i32, i32) {
    %c0_i32 = arith.constant 0 : i32
    %c0_i32_0 = arith.constant 0 : i32
    %c0_i32_1 = arith.constant 0 : i32
    return %c0_i32, %c0_i32_0 : i32, i32
  }
  func.func @transform_8(%arg0: i32) -> (i32, i32) {
    %c0_i32 = arith.constant 0 : i32
    %c0_i32_0 = arith.constant 0 : i32
    %c0_i32_1 = arith.constant 0 : i32
    return %c0_i32, %c0_i32_0 : i32, i32
  }
  func.func @transform_9(%arg0: i32) -> (i32, i32) {
    %c0_i32 = arith.constant 0 : i32
    %c0_i32_0 = arith.constant 0 : i32
    return %arg0, %c0_i32 : i32, i32
  }
}

</mosaic_0001>

<llo_original>
// kernel: tpu_custom_call.1
$region0: #{tpu_custom_call.1}
  #allocation0 [shape = 'u32[]', space=smem, size = 0x4, offset = 0x4, fixed_abs, tag = 'smem constant byte address 0x4 - core index']
  #allocation1 [shape = 'u32[144,128]{1,0:T(1,128)}', space=vmem, size = 0x12000, scoped, tag = 'internal scratch']
  %s0 = inlined_call_operand.hbm [shape: f32[8,8,32], index: 0, kind: input, shape index: {}]
  %s1 = inlined_call_operand.vmem [shape: f32[8,32], index: 1, kind: input, shape index: {}]
  %s2 = inlined_call_operand.vmem [shape: s32[8,1], index: 2, kind: input, shape index: {}]
  %s3 = inlined_call_operand.hbm [shape: f32[32,32], index: 3, kind: input, shape index: {}]
  %s4 = inlined_call_operand.hbm [shape: f32[32,32], index: 4, kind: input, shape index: {}]
  %s5 = inlined_call_operand.vmem [shape: f32[1,32], index: 5, kind: input, shape index: {}]
  %s6 = inlined_call_operand.hbm [shape: f32[32,32], index: 6, kind: input, shape index: {}]
  %s7 = inlined_call_operand.vmem [shape: f32[1,32], index: 7, kind: input, shape index: {}]
  %s8 = inlined_call_operand.vmem [shape: f32[1,32], index: 8, kind: input, shape index: {}]
  %s9 = inlined_call_operand.hbm [shape: f32[8,32], index: 9, kind: output, shape index: {}]
  %s10 = sld [smem:[#allocation0]]
  $region62: #{tpu_custom_call.1} parent=0
    _
  %s12 = ssub.s32 1, %s10
  %s13 = scalar_select 0, %s12, %s10
  $region1: #{tpu_custom_call.1} parent=0
    #allocation2 [shape = 'u8[32768]{0}', space=vmem, size = 0x8000, scoped, tag = 'input window, operand 0, single buffered']
    #allocation3 [shape = 's32[1]{0}', space=sflag, size = 0x4, scoped, tag = 'scoped memory for tpu_custom_call.1']
    #allocation4 [shape = 's32[1]{0}', space=sflag, size = 0x4, scoped, tag = 'scoped memory for tpu_custom_call.1']
    #allocation5 [shape = 'u8[16384]{0}', space=vmem, size = 0x4000, scoped, tag = 'input window, operand 3, single buffered']
    #allocation6 [shape = 's32[1]{0}', space=sflag, size = 0x4, scoped, tag = 'scoped memory for tpu_custom_call.1']
    #allocation7 [shape = 'u8[16384]{0}', space=vmem, size = 0x4000, scoped, tag = 'input window, operand 4, single buffered']
    #allocation8 [shape = 'u8[16384]{0}', space=vmem, size = 0x4000, scoped, tag = 'input window, operand 6, single buffered']
    #allocation9 [shape = 's32[1]{0}', space=sflag, size = 0x4, scoped, tag = 'scoped memory for tpu_custom_call.1']
    #allocation10 [shape = 'u8[4096]{0}', space=vmem, size = 0x1000, scoped, tag = 'output window, operand 0, single buffered']
    %14 = vsyncpa [#allocation3], 0
    %15 = vsyncpa [#allocation6], 0
    %16 = vsyncpa [#allocation9], 0
    %17 = vsyncpa [#allocation4], 0
    // Predicated region
    $region2: #{tpu_custom_call.1} parent=1 // pred_check
      _
    $region3: #{tpu_custom_call.1} parent=1 // pred_check_branch
      %19 = sbr.rel (0) target = $region5
    $region4: #{tpu_custom_call.1} parent=1 // pred_region
      %s21 = ssub.s32 1024, 1024
      %22 = vsyncadd [#allocation3], %s21
      %s23 = sshll.u32 [#allocation2], 4
      %s24 = int_to_ptr.vmem [resolvable:$true] %s23
      %29 = dma.hbm_to_vmem [thread:$0]  %s0, 1024, %s24, [#allocation3], 128, 128, 8
    $region5: #{tpu_custom_call.1} parent=1 // pred_fallthru
      _
    // Predicated region
    $region6: #{tpu_custom_call.1} parent=1 // pred_check
      _
    $region7: #{tpu_custom_call.1} parent=1 // pred_check_branch
      %31 = sbr.rel (0) target = $region9
    $region8: #{tpu_custom_call.1} parent=1 // pred_region
      _
    $region9: #{tpu_custom_call.1} parent=1 // pred_fallthru
      _
    // Predicated region
    $region10: #{tpu_custom_call.1} parent=1 // pred_check
      _
    $region11: #{tpu_custom_call.1} parent=1 // pred_check_branch
      %33 = sbr.rel (0) target = $region13
    $region12: #{tpu_custom_call.1} parent=1 // pred_region
      _
    $region13: #{tpu_custom_call.1} parent=1 // pred_fallthru
      _
    // Predicated region
    $region14: #{tpu_custom_call.1} parent=1 // pred_check
      _
    $region15: #{tpu_custom_call.1} parent=1 // pred_check_branch
      %35 = sbr.rel (0) target = $region17
    $region16: #{tpu_custom_call.1} parent=1 // pred_region
      %s37 = ssub.s32 512, 512
      %38 = vsyncadd [#allocation6], %s37
      %s39 = sshll.u32 [#allocation5], 4
      %s40 = int_to_ptr.vmem [resolvable:$true] %s39
      %45 = dma.hbm_to_vmem [thread:$0]  %s3, 512, %s40, [#allocation6], 128, 128, 8
    $region17: #{tpu_custom_call.1} parent=1 // pred_fallthru
      _
    // Predicated region
    $region18: #{tpu_custom_call.1} parent=1 // pred_check
      _
    $region19: #{tpu_custom_call.1} parent=1 // pred_check_branch
      %47 = sbr.rel (0) target = $region21
    $region20: #{tpu_custom_call.1} parent=1 // pred_region
      %s49 = ssub.s32 512, 512
      %50 = vsyncadd [#allocation6], %s49
      %s51 = sshll.u32 [#allocation7], 4
      %s52 = int_to_ptr.vmem [resolvable:$true] %s51
      %57 = dma.hbm_to_vmem [thread:$0]  %s4, 512, %s52, [#allocation6], 128, 128, 8
    $region21: #{tpu_custom_call.1} parent=1 // pred_fallthru
      _
    // Predicated region
    $region22: #{tpu_custom_call.1} parent=1 // pred_check
      _
    $region23: #{tpu_custom_call.1} parent=1 // pred_check_branch
      %59 = sbr.rel (0) target = $region25
    $region24: #{tpu_custom_call.1} parent=1 // pred_region
      _
    $region25: #{tpu_custom_call.1} parent=1 // pred_fallthru
      _
    // Predicated region
    $region26: #{tpu_custom_call.1} parent=1 // pred_check
      _
    $region27: #{tpu_custom_call.1} parent=1 // pred_check_branch
      %61 = sbr.rel (0) target = $region29
    $region28: #{tpu_custom_call.1} parent=1 // pred_region
      %s63 = ssub.s32 512, 512
      %64 = vsyncadd [#allocation9], %s63
      %s65 = sshll.u32 [#allocation8], 4
      %s66 = int_to_ptr.vmem [resolvable:$true] %s65
      %71 = dma.hbm_to_vmem [thread:$0]  %s6, 512, %s66, [#allocation9], 128, 128, 8
    $region29: #{tpu_custom_call.1} parent=1 // pred_fallthru
      _
    // Predicated region
    $region30: #{tpu_custom_call.1} parent=1 // pred_check
      _
    $region31: #{tpu_custom_call.1} parent=1 // pred_check_branch
      %73 = sbr.rel (0) target = $region33
    $region32: #{tpu_custom_call.1} parent=1 // pred_region
      _
    $region33: #{tpu_custom_call.1} parent=1 // pred_fallthru
      _
    // Predicated region
    $region34: #{tpu_custom_call.1} parent=1 // pred_check
      _
    $region35: #{tpu_custom_call.1} parent=1 // pred_check_branch
      %75 = sbr.rel (0) target = $region37
    $region36: #{tpu_custom_call.1} parent=1 // pred_region
      _
    $region37: #{tpu_custom_call.1} parent=1 // pred_fallthru
      _
    // Predicated region
    $region38: #{tpu_custom_call.1} parent=1 // pred_check
      _
    $region39: #{tpu_custom_call.1} parent=1 // pred_check_branch
      %77 = sbr.rel (0) target = $region41
    $region40: #{tpu_custom_call.1} parent=1 // pred_region
      %78 = dma.done [#allocation3], 1024
    $region41: #{tpu_custom_call.1} parent=1 // pred_fallthru
      _
    // Predicated region
    $region42: #{tpu_custom_call.1} parent=1 // pred_check
      _
    $region43: #{tpu_custom_call.1} parent=1 // pred_check_branch
      %80 = sbr.rel (0) target = $region45
    $region44: #{tpu_custom_call.1} parent=1 // pred_region
      %81 = dma.done [#allocation6], 512
    $region45: #{tpu_custom_call.1} parent=1 // pred_fallthru
      _
    // Predicated region
    $region46: #{tpu_custom_call.1} parent=1 // pred_check
      _
    $region47: #{tpu_custom_call.1} parent=1 // pred_check_branch
      %83 = sbr.rel (0) target = $region49
    $region48: #{tpu_custom_call.1} parent=1 // pred_region
      %84 = dma.done [#allocation6], 512
    $region49: #{tpu_custom_call.1} parent=1 // pred_fallthru
      _
    // Predicated region
    $region50: #{tpu_custom_call.1} parent=1 // pred_check
      _
    $region51: #{tpu_custom_call.1} parent=1 // pred_check_branch
      %86 = sbr.rel (0) target = $region53
    $region52: #{tpu_custom_call.1} parent=1 // pred_region
      %87 = dma.done [#allocation9], 512
    $region53: #{tpu_custom_call.1} parent=1 // pred_fallthru
      _
    %v88 = vld [vmem:[#allocation2] sm:$0xff]
    %v89 = vld [vmem:[#allocation2 + $0x8] sm:$0xff]
    %v90 = vld [vmem:[#allocation2 + $0x10] sm:$0xff]
    %v91 = vld [vmem:[#allocation2 + $0x18] sm:$0xff]
    %v92 = vld [vmem:[#allocation2 + $0x20] sm:$0xff]
    %v93 = vld [vmem:[#allocation2 + $0x28] sm:$0xff]
    %v94 = vld [vmem:[#allocation2 + $0x30] sm:$0xff]
    %v95 = vld [vmem:[#allocation2 + $0x38] sm:$0xff]
    %v96 = vld [vmem:[%s1] sm:$0xff]
    %v97 = vld [vmem:[%s2] sm:$0xff]
    %v98 = vld [vmem:[#allocation7] sm:$0xff]
    %v99 = vld [vmem:[#allocation7 + $0x8] sm:$0xff]
    %v100 = vld [vmem:[#allocation7 + $0x10] sm:$0xff]
    %v101 = vld [vmem:[#allocation7 + $0x18] sm:$0xff]
    %v102 = vld [vmem:[%s5] sm:$0x1]
    %v104 = vlaneseq
    %v105 = vshrl.u32 %v104, 7
    %v106 = vsub.s32 0, %v105
    %v107 = vrot.slane %v102, %v106
    %vm109 = vcmask 261120
    %v111 = vsel %vm109, %v96, 0
    %113 = vmatprep.subr.mxu0 0.0
    %114 = vmatpush1.msra.mxu0 %v98
    %115 = vmatprep.subr.mxu0 0.0
    %116 = vmatpush1.msra.mxu0 %v99
    %117 = vmatprep.subr.mxu0 0.0
    %118 = vmatpush1.msra.mxu0 %v100
    %119 = vmatprep.subr.mxu0 0.0
    %120 = vmatpush1.msra.mxu0 %v101
    %121 = vmatprep.subr.mxu0 0.0
    %122 = vmatpush1.msra.mxu0 0.0
    %123 = vmatprep.subr.mxu0 0.0
    %124 = vmatpush1.msra.mxu0 0.0
    %125 = vmatprep.subr.mxu0 0.0
    %126 = vmatpush1.msra.mxu0 0.0
    %127 = vmatprep.subr.mxu0 0.0
    %128 = vmatpush1.msra.mxu0 0.0
    %129 = vmatprep.subr.mxu0 0.0
    %130 = vmatpush1.msra.mxu0 0.0
    %131 = vmatprep.subr.mxu0 0.0
    %132 = vmatpush1.msra.mxu0 0.0
    %133 = vmatprep.subr.mxu0 0.0
    %134 = vmatpush1.msra.mxu0 0.0
    %135 = vmatprep.subr.mxu0 0.0
    %136 = vmatpush1.msra.mxu0 0.0
    %137 = vmatprep.subr.mxu0 0.0
    %138 = vmatpush1.msra.mxu0 0.0
    %139 = vmatprep.subr.mxu0 0.0
    %140 = vmatpush1.msra.mxu0 0.0
    %141 = vmatprep.subr.mxu0 0.0
    %142 = vmatpush1.msra.mxu0 0.0
    %143 = vmatprep.subr.mxu0 0.0
    %144 = vmatpush1.msra.mxu0 0.0
    %145 = vmatprep.subr.mxu0 0.0
    %146 = vmatpush1.msra.mxu0 0.0
    %147 = vmatprep.subr.mxu0 0.0
    %148 = vmatpush1.msra.mxu0 0.0
    %149 = vmatprep.subr.mxu0 0.0
    %150 = vmatpush1.msra.mxu0 0.0
    %151 = vmatprep.subr.mxu0 0.0
    %152 = vmatpush1.msra.mxu0 0.0
    %153 = vmatprep.subr.mxu0 0.0
    %154 = vmatpush1.msra.mxu0 0.0
    %155 = vmatprep.subr.mxu0 0.0
    %156 = vmatpush1.msra.mxu0 0.0
    %157 = vmatprep.subr.mxu0 0.0
    %158 = vmatpush1.msra.mxu0 0.0
    %159 = vmatprep.subr.mxu0 0.0
    %160 = vmatpush1.msra.mxu0 0.0
    %161 = vmatprep.subr.mxu0 0.0
    %162 = vmatpush1.msra.mxu0 0.0
    %163 = vmatprep.subr.mxu0 0.0
    %164 = vmatpush1.msra.mxu0 0.0
    %165 = vmatprep.subr.mxu0 0.0
    %166 = vmatpush1.msra.mxu0 0.0
    %167 = vmatprep.subr.mxu0 0.0
    %168 = vmatpush1.msra.mxu0 0.0
    %169 = vmatprep.subr.mxu0 0.0
    %170 = vmatpush1.msra.mxu0 0.0
    %171 = vmatprep.subr.mxu0 0.0
    %172 = vmatpush1.msra.mxu0 0.0
    %173 = vmatprep.subr.mxu0 0.0
    %174 = vmatpush1.msra.mxu0 0.0
    %175 = vmatprep.subr.mxu0 0.0
    %176 = vmatpush1.msra.mxu0 0.0
    %177 = vmatprep.mubr.f32.mxu0 0.0
    %178 = vmatmul.mubr.f32.gmra.mrb[0].mxu0 %v111
    %v179 = vpop.f32.mrb[0].mxu0
    %v180 = vadd.f32 %v107, %v179
    %v181 = vpop.f32.mrb[0].mxu0
    %182 = vdwg.mxu0
    %v183 = vld [vmem:[#allocation5] sm:$0xff]
    %v184 = vld [vmem:[#allocation5 + $0x8] sm:$0xff]
    %v185 = vld [vmem:[#allocation5 + $0x10] sm:$0xff]
    %v186 = vld [vmem:[#allocation5 + $0x18] sm:$0xff]
    %v188 = vsel %vm109, %v88, 0
    %v191 = vsel %vm109, %v89, 0
    %v194 = vsel %vm109, %v90, 0
    %v197 = vsel %vm109, %v91, 0
    %v200 = vsel %vm109, %v92, 0
    %v203 = vsel %vm109, %v93, 0
    %v206 = vsel %vm109, %v94, 0
    %v209 = vsel %vm109, %v95, 0
    %211 = vmatprep.subr.mxu0 0.0
    %212 = vmatpush1.msra.mxu0 %v183
    %213 = vmatprep.subr.mxu0 0.0
    %214 = vmatpush1.msra.mxu0 %v184
    %215 = vmatprep.subr.mxu0 0.0
    %216 = vmatpush1.msra.mxu0 %v185
    %217 = vmatprep.subr.mxu0 0.0
    %218 = vmatpush1.msra.mxu0 %v186
    %219 = vmatprep.subr.mxu0 0.0
    %220 = vmatpush1.msra.mxu0 0.0
    %221 = vmatprep.subr.mxu0 0.0
    %222 = vmatpush1.msra.mxu0 0.0
    %223 = vmatprep.subr.mxu0 0.0
    %224 = vmatpush1.msra.mxu0 0.0
    %225 = vmatprep.subr.mxu0 0.0
    %226 = vmatpush1.msra.mxu0 0.0
    %227 = vmatprep.subr.mxu0 0.0
    %228 = vmatpush1.msra.mxu0 0.0
    %229 = vmatprep.subr.mxu0 0.0
    %230 = vmatpush1.msra.mxu0 0.0
    %231 = vmatprep.subr.mxu0 0.0
    %232 = vmatpush1.msra.mxu0 0.0
    %233 = vmatprep.subr.mxu0 0.0
    %234 = vmatpush1.msra.mxu0 0.0
    %235 = vmatprep.subr.mxu0 0.0
    %236 = vmatpush1.msra.mxu0 0.0
    %237 = vmatprep.subr.mxu0 0.0
    %238 = vmatpush1.msra.mxu0 0.0
    %239 = vmatprep.subr.mxu0 0.0
    %240 = vmatpush1.msra.mxu0 0.0
    %241 = vmatprep.subr.mxu0 0.0
    %242 = vmatpush1.msra.mxu0 0.0
    %243 = vmatprep.subr.mxu0 0.0
    %244 = vmatpush1.msra.mxu0 0.0
    %245 = vmatprep.subr.mxu0 0.0
    %246 = vmatpush1.msra.mxu0 0.0
    %247 = vmatprep.subr.mxu0 0.0
    %248 = vmatpush1.msra.mxu0 0.0
    %249 = vmatprep.subr.mxu0 0.0
    %250 = vmatpush1.msra.mxu0 0.0
    %251 = vmatprep.subr.mxu0 0.0
    %252 = vmatpush1.msra.mxu0 0.0
    %253 = vmatprep.subr.mxu0 0.0
    %254 = vmatpush1.msra.mxu0 0.0
    %255 = vmatprep.subr.mxu0 0.0
    %256 = vmatpush1.msra.mxu0 0.0
    %257 = vmatprep.subr.mxu0 0.0
    %258 = vmatpush1.msra.mxu0 0.0
    %259 = vmatprep.subr.mxu0 0.0
    %260 = vmatpush1.msra.mxu0 0.0
    %261 = vmatprep.subr.mxu0 0.0
    %262 = vmatpush1.msra.mxu0 0.0
    %263 = vmatprep.subr.mxu0 0.0
    %264 = vmatpush1.msra.mxu0 0.0
    %265 = vmatprep.subr.mxu0 0.0
    %266 = vmatpush1.msra.mxu0 0.0
    %267 = vmatprep.subr.mxu0 0.0
    %268 = vmatpush1.msra.mxu0 0.0
    %269 = vmatprep.subr.mxu0 0.0
    %270 = vmatpush1.msra.mxu0 0.0
    %271 = vmatprep.subr.mxu0 0.0
    %272 = vmatpush1.msra.mxu0 0.0
    %273 = vmatprep.subr.mxu0 0.0
    %274 = vmatpush1.msra.mxu0 0.0
    %275 = vmatprep.mubr.f32.mxu0 0.0
    %276 = vmatmul.mubr.f32.gmra.mrb[0].mxu0 %v188
    %v277 = vpop.f32.mrb[0].mxu0
    %v278 = vadd.f32 0.0, %v277
    %v279 = vpop.f32.mrb[0].mxu0
    %280 = vmatprep.mubr.f32.mxu0 0.0
    %281 = vmatmul.mubr.f32.gmra.mrb[0].mxu0 %v191
    %v282 = vpop.f32.mrb[0].mxu0
    %v283 = vadd.f32 0.0, %v282
    %v284 = vpop.f32.mrb[0].mxu0
    %285 = vmatprep.mubr.f32.mxu0 0.0
    %286 = vmatmul.mubr.f32.gmra.mrb[0].mxu0 %v194
    %v287 = vpop.f32.mrb[0].mxu0
    %v288 = vadd.f32 0.0, %v287
    %v289 = vpop.f32.mrb[0].mxu0
    %290 = vmatprep.mubr.f32.mxu0 0.0
    %291 = vmatmul.mubr.f32.gmra.mrb[0].mxu0 %v197
    %v292 = vpop.f32.mrb[0].mxu0
    %v293 = vadd.f32 0.0, %v292
    %v294 = vpop.f32.mrb[0].mxu0
    %295 = vmatprep.mubr.f32.mxu0 0.0
    %296 = vmatmul.mubr.f32.gmra.mrb[0].mxu0 %v200
    %v297 = vpop.f32.mrb[0].mxu0
    %v298 = vadd.f32 0.0, %v297
    %v299 = vpop.f32.mrb[0].mxu0
    %300 = vmatprep.mubr.f32.mxu0 0.0
    %301 = vmatmul.mubr.f32.gmra.mrb[0].mxu0 %v203
    %v302 = vpop.f32.mrb[0].mxu0
    %v303 = vadd.f32 0.0, %v302
    %v304 = vpop.f32.mrb[0].mxu0
    %305 = vmatprep.mubr.f32.mxu0 0.0
    %306 = vmatmul.mubr.f32.gmra.mrb[0].mxu0 %v206
    %v307 = vpop.f32.mrb[0].mxu0
    %v308 = vadd.f32 0.0, %v307
    %v309 = vpop.f32.mrb[0].mxu0
    %310 = vmatprep.mubr.f32.mxu0 0.0
    %311 = vmatmul.mubr.f32.gmra.mrb[0].mxu0 %v209
    %v312 = vpop.f32.mrb[0].mxu0
    %v313 = vadd.f32 0.0, %v312
    %v314 = vpop.f32.mrb[0].mxu0
    %315 = vdwg.mxu0
    %v317 = vcombine.high %v180, %v180
    %v319 = vunpack.c.l.s4 1966171168
    %v320 = vunpack.c.0.s8 %v319
    %v321 = vlaneseq
    %v322 = vshrl.u32 %v321, 7
    %v323 = vsub.s32 %v320, %v322
    %v324 = vrot.slane %v180, %v323
    %v326 = vunpack.c.l.s4 1966171168
    %v327 = vunpack.c.0.s8 %v326
    %v328 = vlaneseq
    %v329 = vshrl.u32 %v328, 7
    %v330 = vsub.s32 %v327, %v329
    %v331 = vrot.slane %v317, %v330
    %v332 = vcombine.high %v324, %v324
    %v333 = vcombine.high %v331, %v331
    %v335 = vunpack.c.l.s4 1966171168
    %v336 = vunpack.c.0.s8 %v335
    %v337 = vlaneseq
    %v338 = vshrl.u32 %v337, 7
    %v339 = vsub.s32 %v336, %v338
    %v340 = vrot.slane %v324, %v339
    %v342 = vunpack.c.l.s4 1966171168
    %v343 = vunpack.c.0.s8 %v342
    %v344 = vlaneseq
    %v345 = vshrl.u32 %v344, 7
    %v346 = vsub.s32 %v343, %v345
    %v347 = vrot.slane %v331, %v346
    %v349 = vunpack.c.l.s4 1966171168
    %v350 = vunpack.c.0.s8 %v349
    %v351 = vlaneseq
    %v352 = vshrl.u32 %v351, 7
    %v353 = vsub.s32 %v350, %v352
    %v354 = vrot.slane %v332, %v353
    %v356 = vunpack.c.l.s4 1966171168
    %v357 = vunpack.c.0.s8 %v356
    %v358 = vlaneseq
    %v359 = vshrl.u32 %v358, 7
    %v360 = vsub.s32 %v357, %v359
    %v361 = vrot.slane %v333, %v360
    %v362 = vcombine.high %v340, %v340
    %v363 = vcombine.high %v347, %v347
    %v364 = vcombine.high %v354, %v354
    %v365 = vcombine.high %v361, %v361
    %v366 = vlaneseq
    %v367 = vshrl.u32 %v366, 7
    %v368 = vsub.s32 0, %v367
    %v369 = vrot.slane %v340, %v368
    %v370 = vlaneseq
    %v371 = vshrl.u32 %v370, 7
    %v372 = vsub.s32 0, %v371
    %v373 = vrot.slane %v354, %v372
    %v374 = vlaneseq
    %v375 = vshrl.u32 %v374, 7
    %v376 = vsub.s32 0, %v375
    %v377 = vrot.slane %v362, %v376
    %v378 = vlaneseq
    %v379 = vshrl.u32 %v378, 7
    %v380 = vsub.s32 0, %v379
    %v381 = vrot.slane %v364, %v380
    %v382 = vlaneseq
    %v383 = vshrl.u32 %v382, 7
    %v384 = vsub.s32 0, %v383
    %v385 = vrot.slane %v347, %v384
    %v386 = vlaneseq
    %v387 = vshrl.u32 %v386, 7
    %v388 = vsub.s32 0, %v387
    %v389 = vrot.slane %v361, %v388
    %v390 = vlaneseq
    %v391 = vshrl.u32 %v390, 7
    %v392 = vsub.s32 0, %v391
    %v393 = vrot.slane %v363, %v392
    %v394 = vlaneseq
    %v395 = vshrl.u32 %v394, 7
    %v396 = vsub.s32 0, %v395
    %v397 = vrot.slane %v365, %v396
    %v406 = vadd.f32 %v278, %v369
    %v407 = vadd.f32 %v283, %v373
    %v408 = vadd.f32 %v288, %v377
    %v409 = vadd.f32 %v293, %v381
    %v410 = vadd.f32 %v298, %v385
    %v411 = vadd.f32 %v303, %v389
    %v412 = vadd.f32 %v308, %v393
    %v413 = vadd.f32 %v313, %v397
    %v414 = vmax.f32 %v406, 0.0
    %v415 = vmax.f32 %v407, 0.0
    %v416 = vmax.f32 %v408, 0.0
    %v417 = vmax.f32 %v409, 0.0
    %v418 = vmax.f32 %v410, 0.0
    %v419 = vmax.f32 %v411, 0.0
    %v420 = vmax.f32 %v412, 0.0
    %v421 = vmax.f32 %v413, 0.0
    %v422 = vld [vmem:[#allocation8] sm:$0xff]
    %v423 = vld [vmem:[#allocation8 + $0x8] sm:$0xff]
    %v424 = vld [vmem:[#allocation8 + $0x10] sm:$0xff]
    %v425 = vld [vmem:[#allocation8 + $0x18] sm:$0xff]
    %v426 = vld [vmem:[%s7] sm:$0x1]
    %v428 = vlaneseq
    %v429 = vshrl.u32 %v428, 7
    %v430 = vsub.s32 0, %v429
    %v431 = vrot.slane %v426, %v430
    %v434 = vsel %vm109, %v414, 0
    %v437 = vsel %vm109, %v415, 0
    %v440 = vsel %vm109, %v416, 0
    %v443 = vsel %vm109, %v417, 0
    %v446 = vsel %vm109, %v418, 0
    %v449 = vsel %vm109, %v419, 0
    %v452 = vsel %vm109, %v420, 0
    %v455 = vsel %vm109, %v421, 0
    %457 = vmatprep.subr.mxu0 0.0
    %458 = vmatpush1.msra.mxu0 %v422
    %459 = vmatprep.subr.mxu0 0.0
    %460 = vmatpush1.msra.mxu0 %v423
    %461 = vmatprep.subr.mxu0 0.0
    %462 = vmatpush1.msra.mxu0 %v424
    %463 = vmatprep.subr.mxu0 0.0
    %464 = vmatpush1.msra.mxu0 %v425
    %465 = vmatprep.subr.mxu0 0.0
    %466 = vmatpush1.msra.mxu0 0.0
    %467 = vmatprep.subr.mxu0 0.0
    %468 = vmatpush1.msra.mxu0 0.0
    %469 = vmatprep.subr.mxu0 0.0
    %470 = vmatpush1.msra.mxu0 0.0
    %471 = vmatprep.subr.mxu0 0.0
    %472 = vmatpush1.msra.mxu0 0.0
    %473 = vmatprep.subr.mxu0 0.0
    %474 = vmatpush1.msra.mxu0 0.0
    %475 = vmatprep.subr.mxu0 0.0
    %476 = vmatpush1.msra.mxu0 0.0
    %477 = vmatprep.subr.mxu0 0.0
    %478 = vmatpush1.msra.mxu0 0.0
    %479 = vmatprep.subr.mxu0 0.0
    %480 = vmatpush1.msra.mxu0 0.0
    %481 = vmatprep.subr.mxu0 0.0
    %482 = vmatpush1.msra.mxu0 0.0
    %483 = vmatprep.subr.mxu0 0.0
    %484 = vmatpush1.msra.mxu0 0.0
    %485 = vmatprep.subr.mxu0 0.0
    %486 = vmatpush1.msra.mxu0 0.0
    %487 = vmatprep.subr.mxu0 0.0
    %488 = vmatpush1.msra.mxu0 0.0
    %489 = vmatprep.subr.mxu0 0.0
    %490 = vmatpush1.msra.mxu0 0.0
    %491 = vmatprep.subr.mxu0 0.0
    %492 = vmatpush1.msra.mxu0 0.0
    %493 = vmatprep.subr.mxu0 0.0
    %494 = vmatpush1.msra.mxu0 0.0
    %495 = vmatprep.subr.mxu0 0.0
    %496 = vmatpush1.msra.mxu0 0.0
    %497 = vmatprep.subr.mxu0 0.0
    %498 = vmatpush1.msra.mxu0 0.0
    %499 = vmatprep.subr.mxu0 0.0
    %500 = vmatpush1.msra.mxu0 0.0
    %501 = vmatprep.subr.mxu0 0.0
    %502 = vmatpush1.msra.mxu0 0.0
    %503 = vmatprep.subr.mxu0 0.0
    %504 = vmatpush1.msra.mxu0 0.0
    %505 = vmatprep.subr.mxu0 0.0
    %506 = vmatpush1.msra.mxu0 0.0
    %507 = vmatprep.subr.mxu0 0.0
    %508 = vmatpush1.msra.mxu0 0.0
    %509 = vmatprep.subr.mxu0 0.0
    %510 = vmatpush1.msra.mxu0 0.0
    %511 = vmatprep.subr.mxu0 0.0
    %512 = vmatpush1.msra.mxu0 0.0
    %513 = vmatprep.subr.mxu0 0.0
    %514 = vmatpush1.msra.mxu0 0.0
    %515 = vmatprep.subr.mxu0 0.0
    %516 = vmatpush1.msra.mxu0 0.0
    %517 = vmatprep.subr.mxu0 0.0
    %518 = vmatpush1.msra.mxu0 0.0
    %519 = vmatprep.subr.mxu0 0.0
    %520 = vmatpush1.msra.mxu0 0.0
    %521 = vmatprep.mubr.f32.mxu0 0.0
    %522 = vmatmul.mubr.f32.gmra.mrb[0].mxu0 %v434
    %v523 = vpop.f32.mrb[0].mxu0
    %v524 = vadd.f32 %v431, %v523
    %v525 = vpop.f32.mrb[0].mxu0
    %526 = vmatprep.mubr.f32.mxu0 0.0
    %527 = vmatmul.mubr.f32.gmra.mrb[0].mxu0 %v437
    %v528 = vpop.f32.mrb[0].mxu0
    %v529 = vadd.f32 %v431, %v528
    %v530 = vpop.f32.mrb[0].mxu0
    %531 = vmatprep.mubr.f32.mxu0 0.0
    %532 = vmatmul.mubr.f32.gmra.mrb[0].mxu0 %v440
    %v533 = vpop.f32.mrb[0].mxu0
    %v534 = vadd.f32 %v431, %v533
    %v535 = vpop.f32.mrb[0].mxu0
    %536 = vmatprep.mubr.f32.mxu0 0.0
    %537 = vmatmul.mubr.f32.gmra.mrb[0].mxu0 %v443
    %v538 = vpop.f32.mrb[0].mxu0
    %v539 = vadd.f32 %v431, %v538
    %v540 = vpop.f32.mrb[0].mxu0
    %541 = vmatprep.mubr.f32.mxu0 0.0
    %542 = vmatmul.mubr.f32.gmra.mrb[0].mxu0 %v446
    %v543 = vpop.f32.mrb[0].mxu0
    %v544 = vadd.f32 %v431, %v543
    %v545 = vpop.f32.mrb[0].mxu0
    %546 = vmatprep.mubr.f32.mxu0 0.0
    %547 = vmatmul.mubr.f32.gmra.mrb[0].mxu0 %v449
    %v548 = vpop.f32.mrb[0].mxu0
    %v549 = vadd.f32 %v431, %v548
    %v550 = vpop.f32.mrb[0].mxu0
    %551 = vmatprep.mubr.f32.mxu0 0.0
    %552 = vmatmul.mubr.f32.gmra.mrb[0].mxu0 %v452
    %v553 = vpop.f32.mrb[0].mxu0
    %v554 = vadd.f32 %v431, %v553
    %v555 = vpop.f32.mrb[0].mxu0
    %556 = vmatprep.mubr.f32.mxu0 0.0
    %557 = vmatmul.mubr.f32.gmra.mrb[0].mxu0 %v455
    %v558 = vpop.f32.mrb[0].mxu0
    %v559 = vadd.f32 %v431, %v558
    %v560 = vpop.f32.mrb[0].mxu0
    %561 = vdwg.mxu0
    %v562 = vmax.f32 %v524, 0.0
    %v563 = vmax.f32 %v529, 0.0
    %v564 = vmax.f32 %v534, 0.0
    %v565 = vmax.f32 %v539, 0.0
    %v566 = vmax.f32 %v544, 0.0
    %v567 = vmax.f32 %v549, 0.0
    %v568 = vmax.f32 %v554, 0.0
    %v569 = vmax.f32 %v559, 0.0
    %v570 = vld [vmem:[%s8] sm:$0x1]
    %v572 = vlaneseq
    %v573 = vshrl.u32 %v572, 7
    %v574 = vsub.s32 0, %v573
    %v575 = vrot.slane %v570, %v574
    %v577 = vmul.f32 %v562, %v575
    %v578 = vmul.f32 %v563, %v575
    %v579 = vmul.f32 %v564, %v575
    %v580 = vmul.f32 %v565, %v575
    %v581 = vmul.f32 %v566, %v575
    %v582 = vmul.f32 %v567, %v575
    %v583 = vmul.f32 %v568, %v575
    %v584 = vmul.f32 %v569, %v575
    %v585 = vsel %vm109, %v577, 0.0
    %586 = vadd.xlane.f32.xlu0 %v585
    %v587 = vpop.xlane.xlu0 %586
    %v588 = vsel %vm109, %v578, 0.0
    %589 = vadd.xlane.f32.xlu0 %v588
    %v590 = vpop.xlane.xlu0 %589
    %v591 = vsel %vm109, %v579, 0.0
    %592 = vadd.xlane.f32.xlu0 %v591
    %v593 = vpop.xlane.xlu0 %592
    %v594 = vsel %vm109, %v580, 0.0
    %595 = vadd.xlane.f32.xlu0 %v594
    %v596 = vpop.xlane.xlu0 %595
    %v597 = vsel %vm109, %v581, 0.0
    %598 = vadd.xlane.f32.xlu0 %v597
    %v599 = vpop.xlane.xlu0 %598
    %v600 = vsel %vm109, %v582, 0.0
    %601 = vadd.xlane.f32.xlu0 %v600
    %v602 = vpop.xlane.xlu0 %601
    %v603 = vsel %vm109, %v583, 0.0
    %604 = vadd.xlane.f32.xlu0 %v603
    %v605 = vpop.xlane.xlu0 %604
    %v606 = vsel %vm109, %v584, 0.0
    %607 = vadd.xlane.f32.xlu0 %v606
    %v608 = vpop.xlane.xlu0 %607
    %v609 = vlaneseq
    %v610 = vshrl.u32 %v609, 7
    %v611 = vcombine.high %v97, %v97
    %v613 = vunpack.c.l.s4 1966171168
    %v614 = vunpack.c.0.s8 %v613
    %v615 = vlaneseq
    %v616 = vshrl.u32 %v615, 7
    %v617 = vsub.s32 %v614, %v616
    %v618 = vrot.slane %v97, %v617
    %v620 = vunpack.c.l.s4 1966171168
    %v621 = vunpack.c.0.s8 %v620
    %v622 = vlaneseq
    %v623 = vshrl.u32 %v622, 7
    %v624 = vsub.s32 %v621, %v623
    %v625 = vrot.slane %v611, %v624
    %v626 = vcombine.high %v618, %v618
    %v627 = vcombine.high %v625, %v625
    %v629 = vunpack.c.l.s4 1966171168
    %v630 = vunpack.c.0.s8 %v629
    %v631 = vlaneseq
    %v632 = vshrl.u32 %v631, 7
    %v633 = vsub.s32 %v630, %v632
    %v634 = vrot.slane %v618, %v633
    %v636 = vunpack.c.l.s4 1966171168
    %v637 = vunpack.c.0.s8 %v636
    %v638 = vlaneseq
    %v639 = vshrl.u32 %v638, 7
    %v640 = vsub.s32 %v637, %v639
    %v641 = vrot.slane %v625, %v640
    %v643 = vunpack.c.l.s4 1966171168
    %v644 = vunpack.c.0.s8 %v643
    %v645 = vlaneseq
    %v646 = vshrl.u32 %v645, 7
    %v647 = vsub.s32 %v644, %v646
    %v648 = vrot.slane %v626, %v647
    %v650 = vunpack.c.l.s4 1966171168
    %v651 = vunpack.c.0.s8 %v650
    %v652 = vlaneseq
    %v653 = vshrl.u32 %v652, 7
    %v654 = vsub.s32 %v651, %v653
    %v655 = vrot.slane %v627, %v654
    %v656 = vcombine.high %v634, %v634
    %v657 = vcombine.high %v641, %v641
    %v658 = vcombine.high %v648, %v648
    %v659 = vcombine.high %v655, %v655
    %v660 = vlaneseq
    %v661 = vshrl.u32 %v660, 7
    %v662 = vsub.s32 0, %v661
    %v663 = vrot.slane %v634, %v662
    %v664 = vlaneseq
    %v665 = vshrl.u32 %v664, 7
    %v666 = vsub.s32 0, %v665
    %v667 = vrot.slane %v648, %v666
    %v668 = vlaneseq
    %v669 = vshrl.u32 %v668, 7
    %v670 = vsub.s32 0, %v669
    %v671 = vrot.slane %v656, %v670
    %v672 = vlaneseq
    %v673 = vshrl.u32 %v672, 7
    %v674 = vsub.s32 0, %v673
    %v675 = vrot.slane %v658, %v674
    %v676 = vlaneseq
    %v677 = vshrl.u32 %v676, 7
    %v678 = vsub.s32 0, %v677
    %v679 = vrot.slane %v641, %v678
    %v680 = vlaneseq
    %v681 = vshrl.u32 %v680, 7
    %v682 = vsub.s32 0, %v681
    %v683 = vrot.slane %v655, %v682
    %v684 = vlaneseq
    %v685 = vshrl.u32 %v684, 7
    %v686 = vsub.s32 0, %v685
    %v687 = vrot.slane %v657, %v686
    %v688 = vlaneseq
    %v689 = vshrl.u32 %v688, 7
    %v690 = vsub.s32 0, %v689
    %v691 = vrot.slane %v659, %v690
    %vm692 = vcmp.lt.s32.totalorder %v610, %v663
    %vm693 = vcmp.lt.s32.totalorder %v610, %v667
    %vm694 = vcmp.lt.s32.totalorder %v610, %v671
    %vm695 = vcmp.lt.s32.totalorder %v610, %v675
    %vm696 = vcmp.lt.s32.totalorder %v610, %v679
    %vm697 = vcmp.lt.s32.totalorder %v610, %v683
    %vm698 = vcmp.lt.s32.totalorder %v610, %v687
    %vm699 = vcmp.lt.s32.totalorder %v610, %v691
    %v700 = vsel %vm692, %v587, -1e+30
    %v701 = vsel %vm693, %v590, -1e+30
    %v702 = vsel %vm694, %v593, -1e+30
    %v703 = vsel %vm695, %v596, -1e+30
    %v704 = vsel %vm696, %v599, -1e+30
    %v705 = vsel %vm697, %v602, -1e+30
    %v706 = vsel %vm698, %v605, -1e+30
    %v707 = vsel %vm699, %v608, -1e+30
    %vm708 = vcmask 7168
    %v709 = vsel %vm708, %v700, -inf
    %v710 = vrot.slane %v709, 4
    %v711 = vmax.f32 %v709, %v710
    %v712 = vrot.slane %v711, 2
    %v713 = vmax.f32 %v711, %v712
    %v714 = vrot.slane %v713, 1
    %v715 = vmax.f32 %v713, %v714
    %v716 = vsel %vm708, %v701, -inf
    %v717 = vrot.slane %v716, 4
    %v718 = vmax.f32 %v716, %v717
    %v719 = vrot.slane %v718, 2
    %v720 = vmax.f32 %v718, %v719
    %v721 = vrot.slane %v720, 1
    %v722 = vmax.f32 %v720, %v721
    %v723 = vsel %vm708, %v702, -inf
    %v724 = vrot.slane %v723, 4
    %v725 = vmax.f32 %v723, %v724
    %v726 = vrot.slane %v725, 2
    %v727 = vmax.f32 %v725, %v726
    %v728 = vrot.slane %v727, 1
    %v729 = vmax.f32 %v727, %v728
    %v730 = vsel %vm708, %v703, -inf
    %v731 = vrot.slane %v730, 4
    %v732 = vmax.f32 %v730, %v731
    %v733 = vrot.slane %v732, 2
    %v734 = vmax.f32 %v732, %v733
    %v735 = vrot.slane %v734, 1
    %v736 = vmax.f32 %v734, %v735
    %v737 = vsel %vm708, %v704, -inf
    %v738 = vrot.slane %v737, 4
    %v739 = vmax.f32 %v737, %v738
    %v740 = vrot.slane %v739, 2
    %v741 = vmax.f32 %v739, %v740
    %v742 = vrot.slane %v741, 1
    %v743 = vmax.f32 %v741, %v742
    %v744 = vsel %vm708, %v705, -inf
    %v745 = vrot.slane %v744, 4
    %v746 = vmax.f32 %v744, %v745
    %v747 = vrot.slane %v746, 2
    %v748 = vmax.f32 %v746, %v747
    %v749 = vrot.slane %v748, 1
    %v750 = vmax.f32 %v748, %v749
    %v751 = vsel %vm708, %v706, -inf
    %v752 = vrot.slane %v751, 4
    %v753 = vmax.f32 %v751, %v752
    %v754 = vrot.slane %v753, 2
    %v755 = vmax.f32 %v753, %v754
    %v756 = vrot.slane %v755, 1
    %v757 = vmax.f32 %v755, %v756
    %v758 = vsel %vm708, %v707, -inf
    %v759 = vrot.slane %v758, 4
    %v760 = vmax.f32 %v758, %v759
    %v761 = vrot.slane %v760, 2
    %v762 = vmax.f32 %v760, %v761
    %v763 = vrot.slane %v762, 1
    %v764 = vmax.f32 %v762, %v763
    %v765 = vsub.f32 %v700, %v715
    %v766 = vsub.f32 %v701, %v722
    %v767 = vsub.f32 %v702, %v729
    %v768 = vsub.f32 %v703, %v736
    %v769 = vsub.f32 %v704, %v743
    %v770 = vsub.f32 %v705, %v750
    %v771 = vsub.f32 %v706, %v757
    %v772 = vsub.f32 %v707, %v764
    %v773 = vmul.f32 %v765, 1.442695
    %v774 = vpow.pop %v773
    %v775 = vmul.f32 %v766, 1.442695
    %v776 = vpow.pop %v775
    %v777 = vmul.f32 %v767, 1.442695
    %v778 = vpow.pop %v777
    %v779 = vmul.f32 %v768, 1.442695
    %v780 = vpow.pop %v779
    %v781 = vmul.f32 %v769, 1.442695
    %v782 = vpow.pop %v781
    %v783 = vmul.f32 %v770, 1.442695
    %v784 = vpow.pop %v783
    %v785 = vmul.f32 %v771, 1.442695
    %v786 = vpow.pop %v785
    %v787 = vmul.f32 %v772, 1.442695
    %v788 = vpow.pop %v787
    %v789 = vsel %vm692, %v774, 0.0
    %v790 = vsel %vm693, %v776, 0.0
    %v791 = vsel %vm694, %v778, 0.0
    %v792 = vsel %vm695, %v780, 0.0
    %v793 = vsel %vm696, %v782, 0.0
    %v794 = vsel %vm697, %v784, 0.0
    %v795 = vsel %vm698, %v786, 0.0
    %v796 = vsel %vm699, %v788, 0.0
    %v797 = vsel %vm708, %v789, 0.0
    %v798 = vrot.slane %v797, 4
    %v799 = vadd.f32 %v797, %v798
    %v800 = vrot.slane %v799, 2
    %v801 = vadd.f32 %v799, %v800
    %v802 = vrot.slane %v801, 1
    %v803 = vadd.f32 %v801, %v802
    %v804 = vsel %vm708, %v790, 0.0
    %v805 = vrot.slane %v804, 4
    %v806 = vadd.f32 %v804, %v805
    %v807 = vrot.slane %v806, 2
    %v808 = vadd.f32 %v806, %v807
    %v809 = vrot.slane %v808, 1
    %v810 = vadd.f32 %v808, %v809
    %v811 = vsel %vm708, %v791, 0.0
    %v812 = vrot.slane %v811, 4
    %v813 = vadd.f32 %v811, %v812
    %v814 = vrot.slane %v813, 2
    %v815 = vadd.f32 %v813, %v814
    %v816 = vrot.slane %v815, 1
    %v817 = vadd.f32 %v815, %v816
    %v818 = vsel %vm708, %v792, 0.0
    %v819 = vrot.slane %v818, 4
    %v820 = vadd.f32 %v818, %v819
    %v821 = vrot.slane %v820, 2
    %v822 = vadd.f32 %v820, %v821
    %v823 = vrot.slane %v822, 1
    %v824 = vadd.f32 %v822, %v823
    %v825 = vsel %vm708, %v793, 0.0
    %v826 = vrot.slane %v825, 4
    %v827 = vadd.f32 %v825, %v826
    %v828 = vrot.slane %v827, 2
    %v829 = vadd.f32 %v827, %v828
    %v830 = vrot.slane %v829, 1
    %v831 = vadd.f32 %v829, %v830
    %v832 = vsel %vm708, %v794, 0.0
    %v833 = vrot.slane %v832, 4
    %v834 = vadd.f32 %v832, %v833
    %v835 = vrot.slane %v834, 2
    %v836 = vadd.f32 %v834, %v835
    %v837 = vrot.slane %v836, 1
    %v838 = vadd.f32 %v836, %v837
    %v839 = vsel %vm708, %v795, 0.0
    %v840 = vrot.slane %v839, 4
    %v841 = vadd.f32 %v839, %v840
    %v842 = vrot.slane %v841, 2
    %v843 = vadd.f32 %v841, %v842
    %v844 = vrot.slane %v843, 1
    %v845 = vadd.f32 %v843, %v844
    %v846 = vsel %vm708, %v796, 0.0
    %v847 = vrot.slane %v846, 4
    %v848 = vadd.f32 %v846, %v847
    %v849 = vrot.slane %v848, 2
    %v850 = vadd.f32 %v848, %v849
    %v851 = vrot.slane %v850, 1
    %v852 = vadd.f32 %v850, %v851
    %v853 = vmax.f32 %v803, 1e-30
    %v854 = vmax.f32 %v810, 1e-30
    %v855 = vmax.f32 %v817, 1e-30
    %v856 = vmax.f32 %v824, 1e-30
    %v857 = vmax.f32 %v831, 1e-30
    %v858 = vmax.f32 %v838, 1e-30
    %v859 = vmax.f32 %v845, 1e-30
    %v860 = vmax.f32 %v852, 1e-30
    %v861 = vrcp.pop %v853
    %v862 = vmul.f32 %v789, %v861
    %v863 = vrcp.pop %v854
    %v864 = vmul.f32 %v790, %v863
    %v865 = vrcp.pop %v855
    %v866 = vmul.f32 %v791, %v865
    %v867 = vrcp.pop %v856
    %v868 = vmul.f32 %v792, %v867
    %v869 = vrcp.pop %v857
    %v870 = vmul.f32 %v793, %v869
    %v871 = vrcp.pop %v858
    %v872 = vmul.f32 %v794, %v871
    %v873 = vrcp.pop %v859
    %v874 = vmul.f32 %v795, %v873
    %v875 = vrcp.pop %v860
    %v876 = vmul.f32 %v796, %v875
    %878 = vset.pattern.permute.xlu0 0
    %879 = vperm.xlu0 %878, %v862
    %v880 = vpop.permute.xlu0 %879
    %883 = vset.pattern.permute.xlu0 0
    %884 = vperm.xlu0 %883, %v864
    %v885 = vpop.permute.xlu0 %884
    %888 = vset.pattern.permute.xlu0 0
    %889 = vperm.xlu0 %888, %v866
    %v890 = vpop.permute.xlu0 %889
    %893 = vset.pattern.permute.xlu0 0
    %894 = vperm.xlu0 %893, %v868
    %v895 = vpop.permute.xlu0 %894
    %898 = vset.pattern.permute.xlu0 0
    %899 = vperm.xlu0 %898, %v870
    %v900 = vpop.permute.xlu0 %899
    %903 = vset.pattern.permute.xlu0 0
    %904 = vperm.xlu0 %903, %v872
    %v905 = vpop.permute.xlu0 %904
    %908 = vset.pattern.permute.xlu0 0
    %909 = vperm.xlu0 %908, %v874
    %v910 = vpop.permute.xlu0 %909
    %913 = vset.pattern.permute.xlu0 0
    %914 = vperm.xlu0 %913, %v876
    %v915 = vpop.permute.xlu0 %914
    %v917 = vmul.f32 %v880, %v88
    %v918 = vmul.f32 %v885, %v89
    %v919 = vmul.f32 %v890, %v90
    %v920 = vmul.f32 %v895, %v91
    %v921 = vmul.f32 %v900, %v92
    %v922 = vmul.f32 %v905, %v93
    %v923 = vmul.f32 %v910, %v94
    %v924 = vmul.f32 %v915, %v95
    %v925 = vsel %vm109, %v917, 0.0
    %v926 = vrot.slane %v925, 4
    %v927 = vadd.f32 %v925, %v926
    %v928 = vrot.slane %v927, 2
    %v929 = vadd.f32 %v927, %v928
    %v930 = vrot.slane %v929, 1
    %v931 = vadd.f32 %v929, %v930
    %v932 = vsel %vm109, %v918, 0.0
    %v933 = vrot.slane %v932, 4
    %v934 = vadd.f32 %v932, %v933
    %v935 = vrot.slane %v934, 2
    %v936 = vadd.f32 %v934, %v935
    %v937 = vrot.slane %v936, 1
    %v938 = vadd.f32 %v936, %v937
    %v939 = vsel %vm109, %v919, 0.0
    %v940 = vrot.slane %v939, 4
    %v941 = vadd.f32 %v939, %v940
    %v942 = vrot.slane %v941, 2
    %v943 = vadd.f32 %v941, %v942
    %v944 = vrot.slane %v943, 1
    %v945 = vadd.f32 %v943, %v944
    %v946 = vsel %vm109, %v920, 0.0
    %v947 = vrot.slane %v946, 4
    %v948 = vadd.f32 %v946, %v947
    %v949 = vrot.slane %v948, 2
    %v950 = vadd.f32 %v948, %v949
    %v951 = vrot.slane %v950, 1
    %v952 = vadd.f32 %v950, %v951
    %v953 = vsel %vm109, %v921, 0.0
    %v954 = vrot.slane %v953, 4
    %v955 = vadd.f32 %v953, %v954
    %v956 = vrot.slane %v955, 2
    %v957 = vadd.f32 %v955, %v956
    %v958 = vrot.slane %v957, 1
    %v959 = vadd.f32 %v957, %v958
    %v960 = vsel %vm109, %v922, 0.0
    %v961 = vrot.slane %v960, 4
    %v962 = vadd.f32 %v960, %v961
    %v963 = vrot.slane %v962, 2
    %v964 = vadd.f32 %v962, %v963
    %v965 = vrot.slane %v964, 1
    %v966 = vadd.f32 %v964, %v965
    %v967 = vsel %vm109, %v923, 0.0
    %v968 = vrot.slane %v967, 4
    %v969 = vadd.f32 %v967, %v968
    %v970 = vrot.slane %v969, 2
    %v971 = vadd.f32 %v969, %v970
    %v972 = vrot.slane %v971, 1
    %v973 = vadd.f32 %v971, %v972
    %v974 = vsel %vm109, %v924, 0.0
    %v975 = vrot.slane %v974, 4
    %v976 = vadd.f32 %v974, %v975
    %v977 = vrot.slane %v976, 2
    %v978 = vadd.f32 %v976, %v977
    %v979 = vrot.slane %v978, 1
    %v980 = vadd.f32 %v978, %v979
    %vm989 = vcmask 1041409
    %v990 = vsel %vm989, %v938, %v931
    %vm991 = vcmask 1042434
    %v992 = vsel %vm991, %v945, %v990
    %vm993 = vcmask 1043459
    %v994 = vsel %vm993, %v952, %v992
    %vm995 = vcmask 1044484
    %v996 = vsel %vm995, %v959, %v994
    %vm997 = vcmask 1045509
    %v998 = vsel %vm997, %v966, %v996
    %vm999 = vcmask 1046534
    %v1000 = vsel %vm999, %v973, %v998
    %vm1001 = vcmask 1047559
    %v1002 = vsel %vm1001, %v980, %v1000
    %1004 = vst.msk [vmem:[#allocation10] sm:$0xff] %vm109, %v1002
    // Predicated region
    $region54: #{tpu_custom_call.1} parent=1 // pred_check
      _
    $region55: #{tpu_custom_call.1} parent=1 // pred_check_branch
      %1006 = sbr.rel (0) target = $region57
    $region56: #{tpu_custom_call.1} parent=1 // pred_region
      %s1008 = ssub.s32 128, 128
      %1009 = vsyncadd [#allocation4], %s1008
      %s1011 = sshll.u32 [#allocation10], 4
      %s1012 = int_to_ptr.vmem [resolvable:$true] %s1011
      %1014 = dma.vmem_to_hbm [thread:$0]  %s1012, 128, %s9, [#allocation4]
    $region57: #{tpu_custom_call.1} parent=1 // pred_fallthru
      _
    // Predicated region
    $region58: #{tpu_custom_call.1} parent=1 // pred_check
      _
    $region59: #{tpu_custom_call.1} parent=1 // pred_check_branch
      %1016 = sbr.rel (0) target = $region61
    $region60: #{tpu_custom_call.1} parent=1 // pred_region
      %1017 = dma.done [#allocation4], 128
    $region61: #{tpu_custom_call.1} parent=1 // pred_fallthru
      _
    %1018 = vsyncpa [#allocation3], 1
    %1019 = vsyncpa [#allocation6], 1
    %1020 = vsyncpa [#allocation9], 1
    %1021 = vsyncpa [#allocation4], 1

</llo_original>
